<compile_context>
chip_gen: v6e
topology: v6e:2x2x1
jax: 0.10.0
libtpu: 0.0.40
codegen_flags: <defaults>
</compile_context>

<pallas_src>
import math

import numpy as np
import jax
import jax.numpy as jnp
from jax.experimental import pallas as pl
from jax.experimental.pallas import tpu as pltpu


# ---------------------------------------------------------------------------
# Static configuration (stand-ins for ModelConfig / KernelParam / init_values)
# ---------------------------------------------------------------------------
N_BINS = 16
A0 = 2.0            # Beta distribution shape a
B0 = 5.0            # Beta distribution shape b
LAM_NULL = 0.5      # init_values['lam_null']
BETA_INIT = 1.0     # cfg.beta_init
SIGMA02_INIT = 0.1  # cfg.sigma02_init
RHO = 0.0           # TODO(synk): if rho ever becomes learned, pass it in like the other params

_LANE = 128                    # TPU lane width
_MAX_BLOCK_CELLS = 65536       # 16*65536*4 B = 4 MiB output tile (~8.5 MiB double-buffered)
_SMALL_CELLS_JNP_PATH = 16384  # below this, fused XLA beats a custom call

# log Beta(a0, b0) normalizer — static Python constant.
_LOG_BETA_FN = math.lgamma(A0) + math.lgamma(B0) - math.lgamma(A0 + B0)

# Per-bin constants for the wrapper / reference paths (float64 -> float32).
_R_MID = (np.arange(N_BINS, dtype=np.float64) + 0.5) / N_BINS
_VARPHI = np.exp((A0 - 1.0) * np.log(_R_MID)
                 + (B0 - 1.0) * np.log1p(-_R_MID)
                 - _LOG_BETA_FN)                      # Beta(a0,b0).pdf(r_mid)
_R_MID_F32 = _R_MID.astype(np.float32)
_VARPHI_F32 = _VARPHI.astype(np.float32)


def _mu_kernel(params_ref, sc_ref, mu_t_ref):
    """params_ref: SMEM (2,)              = [sqrt_alpha, sqrt_beta]
       sc_ref:     VMEM (1, block_c)      lane-dense per-cell totals
       mu_t_ref:   VMEM (n_bins, block_c) lane-dense output (bins on sublanes)
    """
    sqrt_alpha = params_ref[0]
    sqrt_beta = params_ref[1]
    alpha = sqrt_alpha * sqrt_alpha
    beta = sqrt_beta * sqrt_beta

    # Static per-bin geometry rebuilt in-register (16 elements; exp/log run on
    # the EUP, completely off the store-bound critical path).  No constant
    # inputs -> no extra DMAs or double-buffers in the pipeline.
    j = jax.lax.broadcasted_iota(jnp.int32, (N_BINS, 1), 0).astype(jnp.float32)
    r = (j + 0.5) * jnp.float32(1.0 / N_BINS)
    varphi = jnp.exp((A0 - 1.0) * jnp.log(r)
                     + (B0 - 1.0) * jnp.log(1.0 - r)
                     - _LOG_BETA_FN)
    coeff = (alpha + beta * varphi) * ((2.0 * math.pi) * r)     # (n_bins, 1)

    # mu^T = coeff (n_bins,1) x sc (1,block_c): one broadcast vmul per output
    # vreg, stored with unmasked full-lane vst (cells ride the lane axis).
    mu_t_ref[...] = coeff * sc_ref[...]


def _choose_block_c(num_cells):
    """Lane-multiple tile width on the cell axis, balanced across grid steps."""
    lane_groups = max(1, pl.cdiv(num_cells, _LANE))
    n_steps = max(1, pl.cdiv(lane_groups * _LANE, _MAX_BLOCK_CELLS))
    # v7x: prefer >= 2 grid steps so "parallel" shards across both TensorCores.
    if n_steps == 1 and lane_groups >= 2:
        n_steps = 2
    return pl.cdiv(lane_groups, n_steps) * _LANE


def policy_network_forward(sc_totals, sqrt_alpha, sqrt_beta, sqrt_sigma02,
                           *, force_pallas=False):
    """Forward pass of PolicyNetwork.

    Returns (mu, sigma):
      mu:    (n_bins, num_cells) float32, bins-major / lane-dense layout.
             mu[j, c] == the module's mu for cell c, bin j.  Kept transposed so
             this HBM-writeback-bound op never pays a materialized transpose.
      sigma: (n_bins,) float32 per-bin row (cell-independent); broadcast lazily
             at the consumer instead of materializing (num_cells, n_bins).
    """
    num_cells = int(sc_totals.shape[0])
    sc = sc_totals.astype(jnp.float32)          # sc_total / 1.0 is a no-op

    alpha = jnp.square(sqrt_alpha).astype(jnp.float32)
    beta = jnp.square(sqrt_beta).astype(jnp.float32)
    sigma02 = jnp.square(sqrt_sigma02).astype(jnp.float32)
    varphi = jnp.asarray(_VARPHI_F32)
    sigma = jnp.sqrt(sigma02 + jnp.float32(RHO) * varphi)       # (n_bins,)

    if num_cells < _SMALL_CELLS_JNP_PATH and not force_pallas:
        # Fast path: tiny outer product; let XLA fuse it into the consumer.
        r = jnp.asarray(_R_MID_F32)
        coeff = (alpha + beta * varphi) * (2.0 * math.pi) * r   # (n_bins,)
        mu = coeff[:, None] * sc[None, :]                       # (n_bins, num_cells)
        return mu, sigma

    block_c = _choose_block_c(num_cells)
    grid = (pl.cdiv(num_cells, block_c),)

    params = jnp.stack([sqrt_alpha, sqrt_beta]).astype(jnp.float32)
    sc2 = sc.reshape(1, num_cells)

    mu = pl.pallas_call(
        _mu_kernel,
        out_shape=jax.ShapeDtypeStruct((N_BINS, num_cells), jnp.float32),
        grid=grid,
        in_specs=[
            pl.BlockSpec(memory_space=pltpu.MemorySpace.SMEM),   # [sqrt_alpha, sqrt_beta]
            pl.BlockSpec((1, block_c), lambda i: (0, i)),        # sc totals (lane-dense)
        ],
        out_specs=pl.BlockSpec((N_BINS, block_c), lambda i: (0, i)),
        compiler_params=pltpu.CompilerParams(
            dimension_semantics=("parallel",)),
    )(params, sc2)
    return mu, sigma


def as_nested_list(mu, sigma):
    """Re-nest into the PyTorch module's List[List[Tuple[mu, sigma]]] form.

    mu is (n_bins, num_cells) bins-major; the numpy transpose below is a
    zero-cost view (single device->host copy, no extra device traffic)."""
    mu_np = np.asarray(mu).T                 # (num_cells, n_bins) view
    sigma_np = np.asarray(sigma)             # (n_bins,)
    num_cells, n_bins = mu_np.shape
    return [[(mu_np[c, j], sigma_np[j]) for j in range(n_bins)]
            for c in range(num_cells)]


def _reference(sc_totals, sqrt_alpha, sqrt_beta, sqrt_sigma02):
    """Pure-JAX reference mirroring the PyTorch loop (cell-major mu)."""
    alpha = jnp.square(sqrt_alpha)
    beta = jnp.square(sqrt_beta)
    sigma02 = jnp.square(sqrt_sigma02)
    r = jnp.asarray(_R_MID_F32)
    varphi = jnp.asarray(_VARPHI_F32)
    mu = (alpha + beta * varphi)[None, :] * sc_totals[:, None] \
        * (2.0 * math.pi) * r[None, :]                           # (num_cells, n_bins)
    sigma = jnp.sqrt(sigma02 + RHO * varphi)                     # (n_bins,)
    return mu, sigma


if __name__ == "__main__":
    key = jax.random.PRNGKey(0)
    key_a, key_b = jax.random.split(key)

    # Deterministic parameters from the module's __init__ formula.
    sqrt_alpha = jnp.float32(math.sqrt(LAM_NULL))
    sqrt_beta = jnp.float32(math.sqrt(BETA_INIT))
    sqrt_sigma02 = jnp.float32(math.sqrt(SIGMA02_INIT))

    # (1) Pallas path: small but multi-tile + ragged last block (grid=2).
    n_cells = 200
    sc_totals = jax.random.uniform(key_a, (n_cells,), dtype=jnp.float32,
                                   minval=1.0, maxval=100.0)
    mu_p, sigma_p = policy_network_forward(sc_totals, sqrt_alpha, sqrt_beta,
                                           sqrt_sigma02, force_pallas=True)
    jax.block_until_ready((mu_p, sigma_p))
    mu_ref, sigma_ref = _reference(sc_totals, sqrt_alpha, sqrt_beta, sqrt_sigma02)
    assert mu_p.shape == (N_BINS, n_cells) and sigma_p.shape == (N_BINS,)
    assert jnp.allclose(mu_p.T, mu_ref, rtol=1e-4, atol=1e-4), "pallas mu mismatch"
    assert jnp.allclose(sigma_p, sigma_ref, rtol=1e-6, atol=1e-6), "pallas sigma mismatch"

    # (2) Pallas path: single partial tile (num_cells < 128).
    n_small = 8
    sc_small = jax.random.uniform(key_b, (n_small,), dtype=jnp.float32,
                                  minval=1.0, maxval=100.0)
    mu_s, sigma_s = policy_network_forward(sc_small, sqrt_alpha, sqrt_beta,
                                           sqrt_sigma02, force_pallas=True)
    jax.block_until_ready((mu_s, sigma_s))
    mu_sref, sigma_sref = _reference(sc_small, sqrt_alpha, sqrt_beta, sqrt_sigma02)
    assert jnp.allclose(mu_s.T, mu_sref, rtol=1e-4, atol=1e-4), "small pallas mu mismatch"
    assert jnp.allclose(sigma_s, sigma_sref, rtol=1e-6, atol=1e-6), "small pallas sigma mismatch"

    # (3) Fused-XLA fast path (default for small num_cells) matches too.
    mu_f, sigma_f = policy_network_forward(sc_small, sqrt_alpha, sqrt_beta,
                                           sqrt_sigma02)
    jax.block_until_ready((mu_f, sigma_f))
    assert jnp.allclose(mu_f.T, mu_sref, rtol=1e-5, atol=1e-5), "fast-path mu mismatch"
    assert jnp.allclose(sigma_f, sigma_sref, rtol=1e-6, atol=1e-6), "fast-path sigma mismatch"

    # Nested List[List[Tuple[mu, sigma]]] structure, as the module returns.
    nested = as_nested_list(mu_s, sigma_s)
    assert len(nested) == n_small and len(nested[0]) == N_BINS

    print("KERNEL_OK")
</pallas_src>

<mosaic_0001>
module attributes {stable_mosaic.version = 11 : i64} {
  func.func @_mu_kernel(%arg0: i32, %arg1: memref<2xf32, #tpu.memory_space<smem>>, %arg2: memref<1x128xf32, #tpu.memory_space<vmem>>, %arg3: memref<16x128xf32, #tpu.memory_space<vmem>>) attributes {dimension_semantics = [#tpu.dimension_semantics<parallel>], iteration_bounds = array<i64: 2>, scalar_prefetch = 0 : i64, scratch_operands = 0 : i64, tpu.core_type = #tpu.core_type<tc>, window_params = [{transform_indices = @transform_0, window_bounds = array<i64: 2>}, {transform_indices = @transform_1, window_bounds = array<i64: 1, 128>}, {transform_indices = @transform_2, window_bounds = array<i64: 16, 128>}]} {
    %c0 = arith.constant 0 : index
    %0 = memref.load %arg1[%c0] : memref<2xf32, #tpu.memory_space<smem>>
    %c1 = arith.constant 1 : index
    %1 = memref.load %arg1[%c1] : memref<2xf32, #tpu.memory_space<smem>>
    %2 = arith.mulf %0, %0 : f32
    %3 = arith.mulf %1, %1 : f32
    %4 = tpu.iota {dimensions = array<i32: 0>} : vector<16x1xi32>
    %5 = arith.sitofp %4 : vector<16x1xi32> to vector<16x1xf32>
    %cst = arith.constant 5.000000e-01 : f32
    %6 = vector.broadcast %cst : f32 to vector<16x1xf32>
    %7 = arith.addf %5, %6 : vector<16x1xf32>
    %cst_0 = arith.constant 6.250000e-02 : f32
    %8 = vector.broadcast %cst_0 : f32 to vector<16x1xf32>
    %9 = arith.mulf %7, %8 : vector<16x1xf32>
    %10 = math.log %9 : vector<16x1xf32>
    %cst_1 = arith.constant 1.000000e+00 : f32
    %11 = vector.broadcast %cst_1 : f32 to vector<16x1xf32>
    %12 = arith.mulf %11, %10 : vector<16x1xf32>
    %cst_2 = arith.constant 1.000000e+00 : f32
    %13 = vector.broadcast %cst_2 : f32 to vector<16x1xf32>
    %14 = arith.subf %13, %9 : vector<16x1xf32>
    %15 = math.log %14 : vector<16x1xf32>
    %cst_3 = arith.constant 4.000000e+00 : f32
    %16 = vector.broadcast %cst_3 : f32 to vector<16x1xf32>
    %17 = arith.mulf %16, %15 : vector<16x1xf32>
    %18 = arith.addf %12, %17 : vector<16x1xf32>
    %cst_4 = arith.constant -3.40119743 : f32
    %19 = vector.broadcast %cst_4 : f32 to vector<16x1xf32>
    %20 = arith.subf %18, %19 : vector<16x1xf32>
    %21 = math.exp %20 : vector<16x1xf32>
    %22 = vector.broadcast %3 : f32 to vector<16x1xf32>
    %23 = arith.mulf %22, %21 : vector<16x1xf32>
    %24 = vector.broadcast %2 : f32 to vector<16x1xf32>
    %25 = arith.addf %24, %23 : vector<16x1xf32>
    %cst_5 = arith.constant 6.28318548 : f32
    %26 = vector.broadcast %cst_5 : f32 to vector<16x1xf32>
    %27 = arith.mulf %26, %9 : vector<16x1xf32>
    %28 = arith.mulf %25, %27 : vector<16x1xf32>
    %c0_6 = arith.constant 0 : index
    %c0_7 = arith.constant 0 : index
    %29 = vector.load %arg2[%c0_6, %c0_7] : memref<1x128xf32, #tpu.memory_space<vmem>>, vector<1x128xf32>
    %30 = vector.broadcast %28 : vector<16x1xf32> to vector<16x128xf32>
    %31 = vector.broadcast %29 : vector<1x128xf32> to vector<16x128xf32>
    %32 = arith.mulf %30, %31 : vector<16x128xf32>
    %c0_8 = arith.constant 0 : index
    %c0_9 = arith.constant 0 : index
    %33 = vector.load %arg3[%c0_8, %c0_9] : memref<16x128xf32, #tpu.memory_space<vmem>>, vector<16x128xf32>
    tpu.vector_store %arg3[%c0_8, %c0_9], %32 {strides = array<i32>} : memref<16x128xf32, #tpu.memory_space<vmem>>, vector<16x128xf32>,
    return
  }
  func.func @transform_0(%arg0: i32) -> i32 {
    %c0_i32 = arith.constant 0 : i32
    %c0_i32_0 = arith.constant 0 : i32
    return %c0_i32 : i32
  }
  func.func @transform_1(%arg0: i32) -> (i32, i32) {
    %c0_i32 = arith.constant 0 : i32
    %c0_i32_0 = arith.constant 0 : i32
    return %c0_i32, %arg0 : i32, i32
  }
  func.func @transform_2(%arg0: i32) -> (i32, i32) {
    %c0_i32 = arith.constant 0 : i32
    %c0_i32_0 = arith.constant 0 : i32
    return %c0_i32, %arg0 : i32, i32
  }
}

</mosaic_0001>

<llo_original>
// kernel: tpu_custom_call.1
$region0: #{tpu_custom_call.1}
  #allocation0 [shape = 'u32[]', space=smem, size = 0x4, offset = 0x4, fixed_abs, tag = 'smem constant byte address 0x4 - core index']
  #allocation1 [shape = 'u32[144,128]{1,0:T(1,128)}', space=vmem, size = 0x12000, scoped, tag = 'internal scratch']
  %s0 = inlined_call_operand.hbm [shape: f32[2], index: 0, kind: input, shape index: {}]
  %s1 = inlined_call_operand.hbm [shape: f32[1,200], index: 1, kind: input, shape index: {}]
  %s2 = inlined_call_operand.hbm [shape: f32[16,200], index: 2, kind: output, shape index: {}]
  %s3 = sld [smem:[#allocation0]]
  $region49: #{tpu_custom_call.1} parent=0
    _
  %s5 = ssub.s32 1, %s3
  %s6 = scalar_select 0, %s5, %s3
  $region1: #{tpu_custom_call.1} parent=0
    #allocation2 [shape = 'u8[512]{0}', space=smem, size = 0x200, scoped, tag = 'input window, operand 0, single buffered']
    #allocation3 [shape = 's32[2]{0}', space=sflag, size = 0x8, scoped, tag = 'scoped memory for tpu_custom_call.1']
    #allocation4 [shape = 's32[2]{0}', space=sflag, size = 0x8, scoped, tag = 'scoped memory for tpu_custom_call.1']
    #allocation5 [shape = 's32[2]{0}', space=sflag, size = 0x8, scoped, tag = 'scoped memory for tpu_custom_call.1']
    #allocation6 [shape = 'u8[1024]{0}', space=vmem, size = 0x400, scoped, tag = 'input window, operand 1']
    #allocation7 [shape = 'u8[16384]{0}', space=vmem, size = 0x4000, scoped, tag = 'output window, operand 0']
    %7 = vsyncpa [#allocation5], 0
    %8 = vsyncpa [#allocation3], 0
    %s9 = scalar_lea.sflag [#allocation3], 1
    %10 = vsyncpa %s9, 0
    %11 = vsyncpa [#allocation4], 0
    %s12 = scalar_lea.sflag [#allocation4], 1
    %13 = vsyncpa %s12, 0
    loop: start=0, step=1, limit=4
    $region2: #{tpu_custom_call.1} parent=1 // loop_pre_header
      _
    $region3: #{tpu_custom_call.1} parent=1 // loop_header
      %s15 = sphi 0, %s19
      %p16 = scmp.ge.s32.totalorder %s15, 4
      %s23 = sphi 0, %s23
      %s25 = sphi 0, %s23
      %s26 = sphi 0, %s25
      %s40 = sphi 0, %s26
      %s46 = sphi 0, %s48
      %s49 = sphi 0, %s46
      %s50 = sphi 0, %s49
      %s66 = sphi 0, %s50
      %s72 = sphi 0, %s74
      %s75 = sphi 0, %s72
      %s76 = sphi 0, %s75
      %s92 = sphi 0, %s76
    $region4: #{tpu_custom_call.1} parent=1 // loop_header_branch
      %18 = sbr.rel (%p16) target = $region8
    $region5: #{tpu_custom_call.1} parent=1 // loop_body
      %s20 = ssub.s32 %s15, 1
      %s21 = ssub.s32 %s15, 2
      %s22 = sadd.s32 %s15, 1
      %s24 = sadd.s32 %s23, 1
      %p27 = scmp.eq.s32.totalorder %s15, 1
      %p28 = scmp.ne.s32.totalorder %s23, %s25
      %p29 = scmp.eq.s32.totalorder %s15, 0
      %p30 = por %p28, %p29
      %p31 = scmp.ne.s32.totalorder %s23, %s25
      %p32 = scmp.eq.s32.totalorder %s20, 1
      %p33 = por %p31, %p32
      %p34 = scmp.ne.s32.totalorder %s25, %s26
      %p35 = scmp.eq.s32.totalorder %s20, 0
      %p36 = por %p34, %p35
      %p37 = scmp.ne.s32.totalorder %s25, %s26
      %p38 = scmp.eq.s32.totalorder %s21, 1
      %p39 = por %p37, %p38
      %p41 = scmp.ne.s32.totalorder %s26, %s40
      %p42 = scmp.eq.s32.totalorder %s21, 0
      %p43 = por %p41, %p42
      %s44 = ssub.s32 %s15, %s22
      %p45 = scmp.eq.s32.totalorder %s44, 0
      %s47 = sadd.s32 %s46, 1
      %s48 = scalar_select %p45, %s46, %s47
      %p51 = pneg %p45
      %p52 = scmp.eq.s32.totalorder %s15, 1
      %p53 = por %p51, %p52
      %p54 = scmp.ne.s32.totalorder %s46, %s49
      %p55 = scmp.eq.s32.totalorder %s15, 0
      %p56 = por %p54, %p55
      %p57 = scmp.ne.s32.totalorder %s46, %s49
      %p58 = scmp.eq.s32.totalorder %s20, 1
      %p59 = por %p57, %p58
      %p60 = scmp.ne.s32.totalorder %s49, %s50
      %p61 = scmp.eq.s32.totalorder %s20, 0
      %p62 = por %p60, %p61
      %p63 = scmp.ne.s32.totalorder %s49, %s50
      %p64 = scmp.eq.s32.totalorder %s21, 1
      %p65 = por %p63, %p64
      %p67 = scmp.ne.s32.totalorder %s50, %s66
      %p68 = scmp.eq.s32.totalorder %s21, 0
      %p69 = por %p67, %p68
      %s70 = ssub.s32 %s15, %s22
      %p71 = scmp.eq.s32.totalorder %s70, 0
      %s73 = sadd.s32 %s72, 1
      %s74 = scalar_select %p71, %s72, %s73
      %p77 = pneg %p71
      %p78 = scmp.eq.s32.totalorder %s15, 1
      %p79 = por %p77, %p78
      %p80 = scmp.ne.s32.totalorder %s72, %s75
      %p81 = scmp.eq.s32.totalorder %s15, 0
      %p82 = por %p80, %p81
      %p83 = scmp.ne.s32.totalorder %s72, %s75
      %p84 = scmp.eq.s32.totalorder %s20, 1
      %p85 = por %p83, %p84
      %p86 = scmp.ne.s32.totalorder %s75, %s76
      %p87 = scmp.eq.s32.totalorder %s20, 0
      %p88 = por %p86, %p87
      %p89 = scmp.ne.s32.totalorder %s75, %s76
      %p90 = scmp.eq.s32.totalorder %s21, 1
      %p91 = por %p89, %p90
      %p93 = scmp.ne.s32.totalorder %s76, %s92
      %p94 = scmp.eq.s32.totalorder %s21, 0
      %p95 = por %p93, %p94
      %p96 = scmp.le.s32.totalorder 1, %s15
      %p97 = scmp.lt.s32.totalorder %s15, 3
      %p98 = pnand %p96, %p97
      %p99 = pneg %p98
      // Predicated region
      $region9: #{tpu_custom_call.1} parent=5 // pred_check
        _
      $region10: #{tpu_custom_call.1} parent=5 // pred_check_branch
        %101 = sbr.rel (%p98) target = $region12
      $region11: #{tpu_custom_call.1} parent=5 // pred_region
        %s102 = ssub.s32 %s15, 1
        // Predicated region
        $region13: #{tpu_custom_call.1} parent=11 // pred_check
          %p103 = pneg %p36
        $region14: #{tpu_custom_call.1} parent=11 // pred_check_branch
          %105 = sbr.rel (%p103) target = $region16
        $region15: #{tpu_custom_call.1} parent=11 // pred_region
          %s107 = ssub.s32 16, 16
          %108 = vsyncadd [#allocation5], %s107
          %111 = dma.hbm_to_smem %s0, 16, [#allocation2], [#allocation5]
        $region16: #{tpu_custom_call.1} parent=11 // pred_fallthru
          _
      $region12: #{tpu_custom_call.1} parent=5 // pred_fallthru
        _
      %p112 = scmp.lt.s32.totalorder %s15, 2
      // Predicated region
      $region17: #{tpu_custom_call.1} parent=5 // pred_check
        %p113 = pneg %p112
      $region18: #{tpu_custom_call.1} parent=5 // pred_check_branch
        %115 = sbr.rel (%p113) target = $region20
      $region19: #{tpu_custom_call.1} parent=5 // pred_region
        // Predicated region
        $region21: #{tpu_custom_call.1} parent=19 // pred_check
          %p116 = pneg %p56
        $region22: #{tpu_custom_call.1} parent=19 // pred_check_branch
          %118 = sbr.rel (%p116) target = $region24
        $region23: #{tpu_custom_call.1} parent=19 // pred_region
          %s119 = sand.u32 %s46, 1
          %s120 = scalar_lea.sflag [#allocation3], %s119
          %s121 = sand.u32 %s46, 1
          %s122 = scalar_lea.vmem [#allocation6], %s121
          %s124 = ssub.s32 16, 16
          %125 = vsyncadd %s120, %s124
          %s126 = smul.addr %s15, 16
          %s127 = scalar_lea.hbm %s1, %s126
          %s129 = sshll.u32 %s122, 4
          %s130 = int_to_ptr.vmem [resolvable:$true] %s129
          %132 = dma.hbm_to_vmem [thread:$0]  %s127, 16, %s130, %s120
        $region24: #{tpu_custom_call.1} parent=19 // pred_fallthru
          _
      $region20: #{tpu_custom_call.1} parent=5 // pred_fallthru
        _
      %p133 = scmp.le.s32.totalorder 1, %s15
      %p134 = scmp.lt.s32.totalorder %s15, 3
      %p135 = pnand %p133, %p134
      %p136 = pneg %p135
      // Predicated region
      $region25: #{tpu_custom_call.1} parent=5 // pred_check
        _
      $region26: #{tpu_custom_call.1} parent=5 // pred_check_branch
        %138 = sbr.rel (%p135) target = $region28
      $region27: #{tpu_custom_call.1} parent=5 // pred_region
        %s139 = ssub.s32 %s15, 1
        // Predicated region
        $region29: #{tpu_custom_call.1} parent=27 // pred_check
          %p140 = pneg %p36
        $region30: #{tpu_custom_call.1} parent=27 // pred_check_branch
          %142 = sbr.rel (%p140) target = $region32
        $region31: #{tpu_custom_call.1} parent=27 // pred_region
          %143 = dma.done [#allocation5], 16
        $region32: #{tpu_custom_call.1} parent=27 // pred_fallthru
          _
        %s144 = sand.u32 %s49, 1
        %s145 = scalar_lea.sflag [#allocation3], %s144
        %s146 = sand.u32 %s49, 1
        %s147 = scalar_lea.vmem [#allocation6], %s146
        // Predicated region
        $region33: #{tpu_custom_call.1} parent=27 // pred_check
          %p148 = pneg %p62
        $region34: #{tpu_custom_call.1} parent=27 // pred_check_branch
          %150 = sbr.rel (%p148) target = $region36
        $region35: #{tpu_custom_call.1} parent=27 // pred_region
          %151 = dma.done %s145, 16
        $region36: #{tpu_custom_call.1} parent=27 // pred_fallthru
          _
        %152 = sfence
        %p153 = pneg %p36
        %p154 = pneg %p33
        %s155 = sand.u32 %s49, 1
        %s156 = scalar_lea.sflag [#allocation3], %s155
        %s157 = sand.u32 %s49, 1
        %s158 = scalar_lea.vmem [#allocation6], %s157
        %p159 = pneg %p62
        %p160 = pneg %p59
        %p161 = pneg %p88
        %p162 = pneg %p85
        %s163 = sand.u32 %s75, 1
        %s164 = scalar_lea.sflag [#allocation4], %s163
        %s165 = sand.u32 %s75, 1
        %s166 = smul.addr %s165, 16
        %s167 = scalar_lea.vmem [#allocation7], %s166
        %s168 = sld [smem:[#allocation2]]
        %s169 = sld [smem:[#allocation2 + $0x1]]
        %s170 = smul.f32 %s168, %s168
        %s171 = smul.f32 %s169, %s169
        %v172 = vlaneseq
        %v173 = vshrl.u32 %v172, 7
        %v174 = vadd.s32 %v173, 8
        %v175 = vcvt.s32.f32 %v173
        %v176 = vcvt.s32.f32 %v174
        %v177 = vadd.f32 %v175, 0.5
        %v178 = vadd.f32 %v176, 0.5
        %v179 = vmul.f32 %v177, 0.0625
        %v180 = vmul.f32 %v178, 0.0625
        %v181 = vlog2.pop %v179
        %v182 = vmul.f32 %v181, 0.6931472
        %v183 = vlog2.pop %v180
        %v184 = vmul.f32 %v183, 0.6931472
        %v185 = vsub.f32 1.0, %v179
        %v186 = vsub.f32 1.0, %v180
        %v187 = vlog2.pop %v185
        %v188 = vmul.f32 %v187, 0.6931472
        %v189 = vlog2.pop %v186
        %v190 = vmul.f32 %v189, 0.6931472
        %v191 = vmul.f32 %v188, 4.0
        %v192 = vmul.f32 %v190, 4.0
        %v193 = vadd.f32 %v182, %v191
        %v194 = vadd.f32 %v184, %v192
        %v195 = vsub.f32 %v193, -3.4011974
        %v196 = vsub.f32 %v194, -3.4011974
        %v197 = vmul.f32 %v195, 1.442695
        %v198 = vpow.pop %v197
        %v199 = vmul.f32 %v196, 1.442695
        %v200 = vpow.pop %v199
        %v201 = vstv %s171
        %v202 = vmul.f32 %v201, %v198
        %v203 = vmul.f32 %v201, %v200
        %v204 = vstv %s170
        %v205 = vadd.f32 %v204, %v202
        %v206 = vadd.f32 %v204, %v203
        %v207 = vmul.f32 %v179, 6.2831855
        %v208 = vmul.f32 %v180, 6.2831855
        %v209 = vmul.f32 %v205, %v207
        %v210 = vmul.f32 %v206, %v208
        %v211 = vld [vmem:[%s147] sm:$0x1]
        %v213 = vlaneseq
        %v214 = vshrl.u32 %v213, 7
        %v215 = vsub.s32 0, %v214
        %v216 = vrot.slane %v211, %v215
        %v218 = vmul.f32 %v209, %v216
        %v219 = vmul.f32 %v210, %v216
        %220 = vst [vmem:[%s167] sm:$0xff] %v218
        %221 = vst [vmem:[%s167 + $0x8] sm:$0xff] %v219
        %s222 = sand.u32 %s75, 1
        %s223 = scalar_lea.sflag [#allocation4], %s222
        %s224 = sand.u32 %s75, 1
        %s225 = smul.addr %s224, 16
        %s226 = scalar_lea.vmem [#allocation7], %s225
        // Predicated region
        $region37: #{tpu_custom_call.1} parent=27 // pred_check
          %p227 = pneg %p85
        $region38: #{tpu_custom_call.1} parent=27 // pred_check_branch
          %229 = sbr.rel (%p227) target = $region40
        $region39: #{tpu_custom_call.1} parent=27 // pred_region
          %s231 = ssub.s32 256, 256
          %232 = vsyncadd %s223, %s231
          %s233 = smul.addr %s20, 128
          %s234 = scalar_lea.hbm %s2, %s233
          %s235 = sshll.u32 %s226, 4
          %s236 = int_to_ptr.vmem [resolvable:$true] %s235
          %241 = dma.vmem_to_hbm [thread:$0]  %s236, 256, %s234, %s223, 128, 256, 8
        $region40: #{tpu_custom_call.1} parent=27 // pred_fallthru
          _
      $region28: #{tpu_custom_call.1} parent=5 // pred_fallthru
        _
      %p242 = scmp.le.s32.totalorder 2, %s15
      // Predicated region
      $region41: #{tpu_custom_call.1} parent=5 // pred_check
        %p243 = pneg %p242
      $region42: #{tpu_custom_call.1} parent=5 // pred_check_branch
        %245 = sbr.rel (%p243) target = $region44
      $region43: #{tpu_custom_call.1} parent=5 // pred_region
        %s246 = ssub.s32 %s15, 2
        // Predicated region
        $region45: #{tpu_custom_call.1} parent=43 // pred_check
          %p247 = pneg %p91
        $region46: #{tpu_custom_call.1} parent=43 // pred_check_branch
          %249 = sbr.rel (%p247) target = $region48
        $region47: #{tpu_custom_call.1} parent=43 // pred_region
          %s250 = sand.u32 %s76, 1
          %s251 = scalar_lea.sflag [#allocation4], %s250
          %s252 = sand.u32 %s76, 1
          %s253 = smul.addr %s252, 16
          %s254 = scalar_lea.vmem [#allocation7], %s253
          %255 = dma.done %s251, 256
        $region48: #{tpu_custom_call.1} parent=43 // pred_fallthru
          _
      $region44: #{tpu_custom_call.1} parent=5 // pred_fallthru
        _
    $region6: #{tpu_custom_call.1} parent=1 // loop_footer
      %s19 = sadd.s32 1, %s15
    $region7: #{tpu_custom_call.1} parent=1 // loop_footer_branch
      %14 = sbr.rel target = $region3
    $region8: #{tpu_custom_call.1} parent=1 // loop_exit
      _
    %256 = vsyncpa [#allocation3], 1
    %s257 = scalar_lea.sflag [#allocation3], 1
    %258 = vsyncpa %s257, 1
    %259 = vsyncpa [#allocation4], 1
    %s260 = scalar_lea.sflag [#allocation4], 1
    %261 = vsyncpa %s260, 1
    %262 = vsyncpa [#allocation5], 1
    %s263 = scalar_lea.sflag [#allocation5], 1
    %264 = vsyncpa %s263, 1

</llo_original>
